<compile_context>
chip_gen: v5e
topology: v5e:2x2
jax: 0.10.0
libtpu: 0.0.40
codegen_flags: <defaults>
</compile_context>

<pallas_src>
import math
import functools

import jax
import jax.numpy as jnp
from jax.experimental import pallas as pl
from jax.experimental.pallas import tpu as pltpu


# --------------------------------------------------------------------------
# helpers
# --------------------------------------------------------------------------
def _pick_tile(dim, pref):
    """Use `pref` if it evenly tiles `dim`, otherwise take the whole dim."""
    return pref if (dim > pref and dim % pref == 0) else dim


def _pick_head_block(h, pref=8):
    """Largest head-group size <= pref that divides h."""
    for hb in range(min(h, pref), 0, -1):
        if h % hb == 0:
            return hb
    return 1


# --------------------------------------------------------------------------
# FP8 quantization glue (mirrors _to_fp8 in the PyTorch reference)
# --------------------------------------------------------------------------
def _to_fp8(x, dtype=jnp.float8_e4m3fn):
    finfo = jnp.finfo(dtype)
    fmax = jnp.float32(finfo.max)
    amax = jnp.maximum(jnp.max(jnp.abs(x.astype(jnp.float32))), 1e-12)
    scale = fmax / amax
    x_f8 = jnp.clip(x.astype(jnp.float32) * scale, -fmax, fmax).astype(dtype)
    return x_f8, (1.0 / scale).astype(jnp.float32)


# --------------------------------------------------------------------------
# Pallas kernel: tiled FP8 (dequantized) matmul  y = (x_q @ w_q^T) * s -> bf16
# --------------------------------------------------------------------------
def _fp8_linear_kernel(x_ref, w_ref, s_ref, o_ref, acc_ref):
    # x_ref: (tm, tk) fp8 | w_ref: (tk, tn) fp8 (weight already transposed)
    # s_ref: (1,) f32 in SMEM (combined dequant scale)
    # acc_ref: (tm, tn) f32 VMEM accumulator, resident across the K grid axis.
    @pl.when(pl.program_id(2) == 0)
    def _init():
        acc_ref[...] = jnp.zeros_like(acc_ref)

    # Widen fp8 -> bf16 inside the kernel (exact; every e4m3 value is
    # representable in bf16) so HBM only moves 1 byte/elem per operand.
    # TODO(synk): on v7x feed the fp8 operands to the MXU directly.
    acc_ref[...] += jnp.dot(x_ref[...].astype(jnp.bfloat16),
                            w_ref[...].astype(jnp.bfloat16),
                            preferred_element_type=jnp.float32)

    @pl.when(pl.program_id(2) == pl.num_programs(2) - 1)
    def _finalize():
        o_ref[...] = (acc_ref[...] * s_ref[0]).astype(o_ref.dtype)


def fp8_linear(x2d, w_t_f8, w_inv, *, tm_pref=512, tn_pref=512, tk_pref=1024):
    """y = dequant(quant(x2d) @ w_t_f8) -> bf16.

    x2d:    (M, K) float activations (quantized per-tensor here).
    w_t_f8: (K, N) float8_e4m3fn, weight pre-quantized & pre-transposed.
    w_inv:  scalar f32 weight dequant scale.
    """
    M, K = x2d.shape
    Kw, N = w_t_f8.shape
    assert K == Kw

    # Per-tensor activation quantization (matches torch._scaled_mm semantics).
    x_f8, x_inv = _to_fp8(x2d)
    scale = (x_inv * w_inv).reshape((1,)).astype(jnp.float32)

    tm = _pick_tile(M, tm_pref)
    tn = _pick_tile(N, tn_pref)
    tk = _pick_tile(K, tk_pref)
    grid = (M // tm, N // tn, K // tk)

    return pl.pallas_call(
        _fp8_linear_kernel,
        out_shape=jax.ShapeDtypeStruct((M, N), jnp.bfloat16),
        grid=grid,
        in_specs=[
            pl.BlockSpec((tm, tk), lambda i, j, k: (i, k)),
            pl.BlockSpec((tk, tn), lambda i, j, k: (k, j)),
            pl.BlockSpec(memory_space=pltpu.MemorySpace.SMEM),
        ],
        out_specs=pl.BlockSpec((tm, tn), lambda i, j, k: (i, j)),
        scratch_shapes=[pltpu.VMEM((tm, tn), jnp.float32)],
        compiler_params=pltpu.CompilerParams(
            dimension_semantics=("parallel", "parallel", "arbitrary"),
            vmem_limit_bytes=32 * 1024 * 1024),
    )(x_f8, w_t_f8, scale)


# --------------------------------------------------------------------------
# Pallas kernel: flash-style causal attention (online softmax, tiled KV axis)
# --------------------------------------------------------------------------
_NEG_BIG = -0.7 * float(jnp.finfo(jnp.float32).max)   # finite mask value


def _flash_attn_kernel(q_ref, k_ref, v_ref, o_ref, m_sc, l_sc, acc_sc,
                       *, tq, tk, scale):
    qi = pl.program_id(2)
    ki = pl.program_id(3)
    q_last = (qi + 1) * tq - 1          # last absolute query row of this tile
    k_first = ki * tk                   # first absolute key column of this tile

    @pl.when(ki == 0)
    def _init():
        m_sc[...] = jnp.full_like(m_sc, _NEG_BIG)
        l_sc[...] = jnp.zeros_like(l_sc)
        acc_sc[...] = jnp.zeros_like(acc_sc)

    # Causal tile skip: a KV tile contributes only if its first key column is
    # not past the last query row of this Q tile.  (ki == 0 is always live, so
    # every row's running max is finite before any fully-masked rows appear.)
    @pl.when(k_first <= q_last)
    def _compute():
        q = q_ref[0]                                   # (Hb, tq, D) bf16
        k = k_ref[0]                                   # (Hb, tk, D) bf16
        v = v_ref[0]                                   # (Hb, tk, D) bf16
        hb = q.shape[0]

        # bf16 MXU matmul, f32 accumulation.
        s = jnp.einsum("hqd,hkd->hqk", q, k,
                       preferred_element_type=jnp.float32) * scale
        row = jax.lax.broadcasted_iota(jnp.int32, (hb, tq, tk), 1) + qi * tq
        col = jax.lax.broadcasted_iota(jnp.int32, (hb, tq, tk), 2) + k_first
        s = jnp.where(col <= row, s, _NEG_BIG)

        m_prev = m_sc[...]
        m_new = jnp.maximum(m_prev, jnp.max(s, axis=-1, keepdims=True))
        alpha = jnp.exp(m_prev - m_new)
        p = jnp.exp(s - m_new)
        l_sc[...] = alpha * l_sc[...] + jnp.sum(p, axis=-1, keepdims=True)
        acc_sc[...] = alpha * acc_sc[...] + jnp.einsum(
            "hqk,hkd->hqd", p.astype(v.dtype), v,
            preferred_element_type=jnp.float32)
        m_sc[...] = m_new

    # Last KV tile that touches this Q tile -> normalize and emit.
    @pl.when(ki == q_last // tk)
    def _finalize():
        o_ref[0] = (acc_sc[...] *
                    pl.reciprocal(l_sc[...], approx=True)).astype(o_ref.dtype)


def causal_attention(q, k, v, *, tq_pref=128, tk_pref=128):
    """q, k, v: (B, H, T, D) bf16 -> (B, H, T, D) bf16 causal SDPA."""
    b, h, t, d = q.shape
    hb = _pick_head_block(h)            # heads batched per grid step
    tq = _pick_tile(t, tq_pref)
    tk = _pick_tile(t, tk_pref)
    grid = (b, h // hb, t // tq, t // tk)

    q_spec = pl.BlockSpec((1, hb, tq, d), lambda bi, hg, qi, ki: (bi, hg, qi, 0))
    kv_spec = pl.BlockSpec((1, hb, tk, d), lambda bi, hg, qi, ki: (bi, hg, ki, 0))
    o_spec = pl.BlockSpec((1, hb, tq, d), lambda bi, hg, qi, ki: (bi, hg, qi, 0))

    kernel = functools.partial(_flash_attn_kernel, tq=tq, tk=tk,
                               scale=1.0 / math.sqrt(d))
    return pl.pallas_call(
        kernel,
        out_shape=jax.ShapeDtypeStruct((b, h, t, d), jnp.bfloat16),
        grid=grid,
        in_specs=[q_spec, kv_spec, kv_spec],
        out_specs=o_spec,
        scratch_shapes=[
            pltpu.VMEM((hb, tq, 1), jnp.float32),    # running max  m
            pltpu.VMEM((hb, tq, 1), jnp.float32),    # running sum  l
            pltpu.VMEM((hb, tq, d), jnp.float32),    # output accumulator
        ],
        compiler_params=pltpu.CompilerParams(
            dimension_semantics=("parallel", "parallel", "parallel",
                                 "arbitrary")),
    )(q, k, v)


# --------------------------------------------------------------------------
# CausalSelfAttention module (forward only)
# --------------------------------------------------------------------------
class CausalSelfAttentionPallas:
    def __init__(self, n_embd, n_head, key):
        assert n_embd % n_head == 0
        self.n_embd = n_embd
        self.n_head = n_head
        k1, k2 = jax.random.split(key)
        # trunc_normal_(std=0.02) with default +/-2 cutoffs is +/-100 sigma,
        # numerically a plain normal * 0.02.  bias=False in the reference.
        w_attn = jax.random.normal(k1, (3 * n_embd, n_embd), jnp.float32) * 0.02
        w_proj = jax.random.normal(k2, (n_embd, n_embd), jnp.float32) * 0.02
        # Weights are static: quantize ONCE and pre-transpose to (K, N) fp8.
        w_attn_f8, self.w_attn_inv = _to_fp8(w_attn)
        w_proj_f8, self.w_proj_inv = _to_fp8(w_proj)
        self.w_attn_t = jnp.asarray(w_attn_f8.T)     # (C, 3C)  fp8
        self.w_proj_t = jnp.asarray(w_proj_f8.T)     # (C, C)   fp8

    def __call__(self, x):
        B, T, C = x.shape
        H, D = self.n_head, C // self.n_head

        qkv = fp8_linear(x.reshape(-1, C), self.w_attn_t, self.w_attn_inv)
        qkv = qkv.reshape(B, T, 3, H, D)
        # TODO(synk): when Hb*D is a multiple of 128, slice q/k/v head columns
        # directly out of the (B*T, 3C) slab in the attention index_map and
        # drop these transposes entirely.
        q = qkv[:, :, 0].transpose(0, 2, 1, 3)       # (B, H, T, D) bf16
        k = qkv[:, :, 1].transpose(0, 2, 1, 3)
        v = qkv[:, :, 2].transpose(0, 2, 1, 3)

        y = causal_attention(q, k, v)                # (B, H, T, D) bf16
        y = y.transpose(0, 2, 1, 3).reshape(B * T, C)

        y = fp8_linear(y, self.w_proj_t, self.w_proj_inv)
        return y.reshape(B, T, C)                    # (B, T, C) bf16


if __name__ == "__main__":
    # small shapes consistent with the module: B=2, T=16, n_embd=32, n_head=4
    B, T, n_embd, n_head = 2, 16, 32, 4
    key = jax.random.PRNGKey(0)
    kx, kp = jax.random.split(key)
    x = jax.random.normal(kx, (B, T, n_embd), jnp.float32)

    attn = CausalSelfAttentionPallas(n_embd, n_head, kp)
    y = attn(x)
    y = jax.block_until_ready(y)
    assert y.shape == (B, T, n_embd) and y.dtype == jnp.bfloat16
    print("KERNEL_OK")
</pallas_src>

<mosaic_0001>
module attributes {stable_mosaic.version = 11 : i64} {
  func.func @_fp8_linear_kernel(%arg0: i32, %arg1: i32, %arg2: i32, %arg3: memref<32x32xf8E4M3FN, #tpu.memory_space<vmem>>, %arg4: memref<32x96xf8E4M3FN, #tpu.memory_space<vmem>>, %arg5: memref<1xf32, #tpu.memory_space<smem>>, %arg6: memref<32x96xbf16, #tpu.memory_space<vmem>>, %arg7: memref<32x96xf32, #tpu.memory_space<vmem>>) attributes {dimension_semantics = [#tpu.dimension_semantics<parallel>, #tpu.dimension_semantics<parallel>, #tpu.dimension_semantics<arbitrary>], iteration_bounds = array<i64: 1, 1, 1>, scalar_prefetch = 0 : i64, scratch_operands = 1 : i64, tpu.core_type = #tpu.core_type<tc>, window_params = [{transform_indices = @transform_0, window_bounds = array<i64: 32, 32>}, {transform_indices = @transform_1, window_bounds = array<i64: 32, 96>}, {transform_indices = @transform_2, window_bounds = array<i64: 1>}, {transform_indices = @transform_3, window_bounds = array<i64: 32, 96>}]} {
    %c0_i32 = arith.constant 0 : i32
    %0 = arith.cmpi eq, %arg2, %c0_i32 : i32
    %1 = arith.extui %0 : i1 to i32
    %c0_i32_0 = arith.constant 0 : i32
    %2 = arith.cmpi ne, %1, %c0_i32_0 : i32
    scf.if %2 {
      %cst_10 = arith.constant 0.000000e+00 : f32
      %14 = vector.broadcast %cst_10 : f32 to vector<32x96xf32>
      %c0_11 = arith.constant 0 : index
      %c0_12 = arith.constant 0 : index
      %15 = vector.load %arg7[%c0_11, %c0_12] : memref<32x96xf32, #tpu.memory_space<vmem>>, vector<32x96xf32>
      tpu.vector_store %arg7[%c0_11, %c0_12], %14 {strides = array<i32>} : memref<32x96xf32, #tpu.memory_space<vmem>>, vector<32x96xf32>,
    } else {
    }
    %c0 = arith.constant 0 : index
    %c0_1 = arith.constant 0 : index
    %3 = vector.load %arg7[%c0, %c0_1] : memref<32x96xf32, #tpu.memory_space<vmem>>, vector<32x96xf32>
    %c0_2 = arith.constant 0 : index
    %c0_3 = arith.constant 0 : index
    %4 = vector.load %arg3[%c0_2, %c0_3] : memref<32x32xf8E4M3FN, #tpu.memory_space<vmem>>, vector<32x32xf8E4M3FN>
    %5 = arith.extf %4 : vector<32x32xf8E4M3FN> to vector<32x32xbf16>
    %c0_4 = arith.constant 0 : index
    %c0_5 = arith.constant 0 : index
    %6 = vector.load %arg4[%c0_4, %c0_5] : memref<32x96xf8E4M3FN, #tpu.memory_space<vmem>>, vector<32x96xf8E4M3FN>
    %7 = arith.extf %6 : vector<32x96xf8E4M3FN> to vector<32x96xbf16>
    %cst = arith.constant dense<0.000000e+00> : vector<32x96xf32>
    %8 = tpu.matmul %5, %7, %cst {dimension_numbers = #tpu.dot_dimension_numbers<[1], [0], [0], [1], [0, 0, 1, 1], [], []>} : vector<32x32xbf16>, vector<32x96xbf16>, vector<32x96xf32> -> vector<32x96xf32>
    %9 = arith.addf %3, %8 : vector<32x96xf32>
    %c0_6 = arith.constant 0 : index
    %c0_7 = arith.constant 0 : index
    %10 = vector.load %arg7[%c0_6, %c0_7] : memref<32x96xf32, #tpu.memory_space<vmem>>, vector<32x96xf32>
    tpu.vector_store %arg7[%c0_6, %c0_7], %9 {strides = array<i32>} : memref<32x96xf32, #tpu.memory_space<vmem>>, vector<32x96xf32>,
    %c0_i32_8 = arith.constant 0 : i32
    %11 = arith.cmpi eq, %arg2, %c0_i32_8 : i32
    %12 = arith.extui %11 : i1 to i32
    %c0_i32_9 = arith.constant 0 : i32
    %13 = arith.cmpi ne, %12, %c0_i32_9 : i32
    scf.if %13 {
      %c0_10 = arith.constant 0 : index
      %c0_11 = arith.constant 0 : index
      %14 = vector.load %arg7[%c0_10, %c0_11] : memref<32x96xf32, #tpu.memory_space<vmem>>, vector<32x96xf32>
      %c0_12 = arith.constant 0 : index
      %15 = memref.load %arg5[%c0_12] : memref<1xf32, #tpu.memory_space<smem>>
      %16 = vector.broadcast %15 : f32 to vector<32x96xf32>
      %17 = arith.mulf %14, %16 : vector<32x96xf32>
      %18 = arith.truncf %17 : vector<32x96xf32> to vector<32x96xbf16>
      %c0_13 = arith.constant 0 : index
      %c0_14 = arith.constant 0 : index
      %19 = vector.load %arg6[%c0_13, %c0_14] : memref<32x96xbf16, #tpu.memory_space<vmem>>, vector<32x96xbf16>
      tpu.vector_store %arg6[%c0_13, %c0_14], %18 {strides = array<i32>} : memref<32x96xbf16, #tpu.memory_space<vmem>>, vector<32x96xbf16>,
    } else {
    }
    return
  }
  func.func @transform_0(%arg0: i32, %arg1: i32, %arg2: i32) -> (i32, i32) {
    %c0_i32 = arith.constant 0 : i32
    return %arg0, %arg2 : i32, i32
  }
  func.func @transform_1(%arg0: i32, %arg1: i32, %arg2: i32) -> (i32, i32) {
    %c0_i32 = arith.constant 0 : i32
    return %arg2, %arg1 : i32, i32
  }
  func.func @transform_2(%arg0: i32, %arg1: i32, %arg2: i32) -> i32 {
    %c0_i32 = arith.constant 0 : i32
    %c0_i32_0 = arith.constant 0 : i32
    return %c0_i32 : i32
  }
  func.func @transform_3(%arg0: i32, %arg1: i32, %arg2: i32) -> (i32, i32) {
    %c0_i32 = arith.constant 0 : i32
    return %arg0, %arg1 : i32, i32
  }
}

</mosaic_0001>

<llo_original>
// kernel: tpu_custom_call.1
$region0: #{tpu_custom_call.1}
  #allocation0 [shape = 'u32[]', space=smem, size = 0x4, offset = 0x4, fixed_abs, tag = 'smem constant byte address 0x4 - core index']
  #allocation1 [shape = 'u32[72,128]{1,0:T(1,128)}', space=vmem, size = 0x9000, scoped, tag = 'internal scratch']
  #allocation2 [shape = 'f32[32,96]{1,0:T(8,128)}', space=vmem, size = 0x4000, scoped, tag = 'scratch operand']
  #allocation3 [shape = 'f32[1]{0:T(128)S(6)}', space=smem, size = 0x200, scoped, tag = 'scoped memory for tpu_custom_call.1']
  %s0 = inlined_call_operand.hbm [shape: f8e4m3fn[32,32], index: 0, kind: input, shape index: {}]
  %s1 = inlined_call_operand.hbm [shape: f8e4m3fn[32,96], index: 1, kind: input, shape index: {}]
  %s2 = inlined_call_operand.<no memory space> [shape: f32[1], index: 2, kind: input, shape index: {}]
  %s3 = inlined_call_operand.hbm [shape: bf16[32,96], index: 3, kind: output, shape index: {}]
  %s4 = sld [smem:[#allocation0]]
  $region46: #{tpu_custom_call.1} parent=0
    _
  %s6 = ssub.s32 1, %s4
  %s7 = scalar_select 0, %s6, %s4
  %8 = sst [smem:[#allocation3]] %s2
  $region1: #{tpu_custom_call.1} parent=0
    #allocation4 [shape = 'u8[4096]{0}', space=vmem, size = 0x1000, scoped, tag = 'input window, operand 0, single buffered']
    #allocation5 [shape = 's32[1]{0}', space=sflag, size = 0x4, scoped, tag = 'scoped memory for tpu_custom_call.1']
    #allocation6 [shape = 's32[1]{0}', space=sflag, size = 0x4, scoped, tag = 'scoped memory for tpu_custom_call.1']
    #allocation7 [shape = 'u8[4096]{0}', space=vmem, size = 0x1000, scoped, tag = 'input window, operand 1, single buffered']
    #allocation8 [shape = 's32[1]{0}', space=sflag, size = 0x4, scoped, tag = 'scoped memory for tpu_custom_call.1']
    #allocation9 [shape = 'u8[8192]{0}', space=vmem, size = 0x2000, scoped, tag = 'output window, operand 0, single buffered']
    %9 = vsyncpa [#allocation5], 0
    %10 = vsyncpa [#allocation8], 0
    %11 = vsyncpa [#allocation6], 0
    // Predicated region
    $region2: #{tpu_custom_call.1} parent=1 // pred_check
      _
    $region3: #{tpu_custom_call.1} parent=1 // pred_check_branch
      %13 = sbr.rel (0) target = $region5
    $region4: #{tpu_custom_call.1} parent=1 // pred_region
      %15 = vsyncadd [#allocation5], 0
      %s17 = sshll.u32 %s0, 4
      %s18 = int_to_ptr.hbm [resolvable:$true] %s17
      %s19 = sshll.u32 [#allocation4], 4
      %s20 = int_to_ptr.vmem [resolvable:$true] %s19
      %22 = dma.hbm_to_vmem [thread:$0]  %s18, 128, %s20, [#allocation5]
    $region5: #{tpu_custom_call.1} parent=1 // pred_fallthru
      _
    // Predicated region
    $region6: #{tpu_custom_call.1} parent=1 // pred_check
      _
    $region7: #{tpu_custom_call.1} parent=1 // pred_check_branch
      %24 = sbr.rel (0) target = $region9
    $region8: #{tpu_custom_call.1} parent=1 // pred_region
      %26 = vsyncadd [#allocation8], 0
      %s28 = sshll.u32 %s1, 4
      %s29 = int_to_ptr.hbm [resolvable:$true] %s28
      %s30 = sshll.u32 [#allocation7], 4
      %s31 = int_to_ptr.vmem [resolvable:$true] %s30
      %33 = dma.hbm_to_vmem [thread:$0]  %s29, 128, %s31, [#allocation8]
    $region9: #{tpu_custom_call.1} parent=1 // pred_fallthru
      _
    // Predicated region
    $region10: #{tpu_custom_call.1} parent=1 // pred_check
      _
    $region11: #{tpu_custom_call.1} parent=1 // pred_check_branch
      %35 = sbr.rel (0) target = $region13
    $region12: #{tpu_custom_call.1} parent=1 // pred_region
      _
    $region13: #{tpu_custom_call.1} parent=1 // pred_fallthru
      _
    // Predicated region
    $region14: #{tpu_custom_call.1} parent=1 // pred_check
      _
    $region15: #{tpu_custom_call.1} parent=1 // pred_check_branch
      %37 = sbr.rel (0) target = $region17
    $region16: #{tpu_custom_call.1} parent=1 // pred_region
      %39 = dma.done [#allocation5], 128
    $region17: #{tpu_custom_call.1} parent=1 // pred_fallthru
      _
    // Predicated region
    $region18: #{tpu_custom_call.1} parent=1 // pred_check
      _
    $region19: #{tpu_custom_call.1} parent=1 // pred_check_branch
      %41 = sbr.rel (0) target = $region21
    $region20: #{tpu_custom_call.1} parent=1 // pred_region
      %43 = dma.done [#allocation8], 128
    $region21: #{tpu_custom_call.1} parent=1 // pred_fallthru
      _
    %p45 = scmp.eq.s32.totalorder 0, 0
    // Predicated region
    $region22: #{tpu_custom_call.1} parent=1 // pred_check
      %p46 = pneg %p45
    $region23: #{tpu_custom_call.1} parent=1 // pred_check_branch
      %48 = sbr.rel (%p46) target = $region25
    $region24: #{tpu_custom_call.1} parent=1 // pred_region
      %vm49 = vcmask 785408
      %50 = vst.msk [vmem:[#allocation2] sm:$0xff] %vm49, 0.0
      %51 = vst.msk [vmem:[#allocation2 + $0x8] sm:$0xff] %vm49, 0.0
      %52 = vst.msk [vmem:[#allocation2 + $0x10] sm:$0xff] %vm49, 0.0
      %53 = vst.msk [vmem:[#allocation2 + $0x18] sm:$0xff] %vm49, 0.0
    $region25: #{tpu_custom_call.1} parent=1 // pred_fallthru
      _
    %v54 = vld [vmem:[#allocation2] sm:$0xff]
    %v55 = vld [vmem:[#allocation2 + $0x8] sm:$0xff]
    %v56 = vld [vmem:[#allocation2 + $0x10] sm:$0xff]
    %v57 = vld [vmem:[#allocation2 + $0x18] sm:$0xff]
    %v58 = vld [vmem:[#allocation4] sm:$0xff]
    $region26: #{tpu_custom_call.1} parent=1
      #allocation10 [shape = 'u8[4096]{0}', space=vmem, size = 0x1000, scoped, tag = 'scoped memory for tpu_custom_call.1']
      %59 = vst [vmem:[#allocation10] sm:$0xff] %v58
      %v60 = vld [vmem:[#allocation10] sm:$0x3]
      %v61 = vunpack.c.0.f8e4m3b11 %v60
      %v62 = vunpack.c.1.f8e4m3b11 %v60
      %v63 = vunpack.c.2.f8e4m3b11 %v60
      %v64 = vunpack.c.3.f8e4m3b11 %v60
      %v65 = vand.u32 2147483647, %v61
      %vm66 = vcmp.gt.f32.partialorder %v65, 29.0
      %vm67 = vcmp.ne.f32.partialorder %v61, %v61
      %v68 = vmul.f32 %v61, 16.0
      %v69 = vsel %vm67, -0.0, %v68
      %v70 = vsel %vm66, nan, %v69
      %v71 = vand.u32 2147483647, %v62
      %vm72 = vcmp.gt.f32.partialorder %v71, 29.0
      %vm73 = vcmp.ne.f32.partialorder %v62, %v62
      %v74 = vmul.f32 %v62, 16.0
      %v75 = vsel %vm73, -0.0, %v74
      %v76 = vsel %vm72, nan, %v75
      %v77 = vand.u32 2147483647, %v63
      %vm78 = vcmp.gt.f32.partialorder %v77, 29.0
      %vm79 = vcmp.ne.f32.partialorder %v63, %v63
      %v80 = vmul.f32 %v63, 16.0
      %v81 = vsel %vm79, -0.0, %v80
      %v82 = vsel %vm78, nan, %v81
      %v83 = vand.u32 2147483647, %v64
      %vm84 = vcmp.gt.f32.partialorder %v83, 29.0
      %vm85 = vcmp.ne.f32.partialorder %v64, %v64
      %v86 = vmul.f32 %v64, 16.0
      %v87 = vsel %vm85, -0.0, %v86
      %v88 = vsel %vm84, nan, %v87
    $region27: #{tpu_custom_call.1} parent=1
      #allocation11 [shape = 'u8[4096]{0}', space=vmem, size = 0x1000, scoped, tag = 'scoped memory for tpu_custom_call.1']
      %89 = vst [vmem:[#allocation11] sm:$0xff] %v58
      %s90 = scalar_lea.vmem [#allocation11], 2
      %v91 = vld [vmem:[%s90] sm:$0x3]
      %v92 = vunpack.c.0.f8e4m3b11 %v91
      %v93 = vunpack.c.1.f8e4m3b11 %v91
      %v94 = vunpack.c.2.f8e4m3b11 %v91
      %v95 = vunpack.c.3.f8e4m3b11 %v91
      %v96 = vand.u32 2147483647, %v92
      %vm97 = vcmp.gt.f32.partialorder %v96, 29.0
      %vm98 = vcmp.ne.f32.partialorder %v92, %v92
      %v99 = vmul.f32 %v92, 16.0
      %v100 = vsel %vm98, -0.0, %v99
      %v101 = vsel %vm97, nan, %v100
      %v102 = vand.u32 2147483647, %v93
      %vm103 = vcmp.gt.f32.partialorder %v102, 29.0
      %vm104 = vcmp.ne.f32.partialorder %v93, %v93
      %v105 = vmul.f32 %v93, 16.0
      %v106 = vsel %vm104, -0.0, %v105
      %v107 = vsel %vm103, nan, %v106
      %v108 = vand.u32 2147483647, %v94
      %vm109 = vcmp.gt.f32.partialorder %v108, 29.0
      %vm110 = vcmp.ne.f32.partialorder %v94, %v94
      %v111 = vmul.f32 %v94, 16.0
      %v112 = vsel %vm110, -0.0, %v111
      %v113 = vsel %vm109, nan, %v112
      %v114 = vand.u32 2147483647, %v95
      %vm115 = vcmp.gt.f32.partialorder %v114, 29.0
      %vm116 = vcmp.ne.f32.partialorder %v95, %v95
      %v117 = vmul.f32 %v95, 16.0
      %v118 = vsel %vm116, -0.0, %v117
      %v119 = vsel %vm115, nan, %v118
    $region28: #{tpu_custom_call.1} parent=1
      #allocation12 [shape = 'u8[4096]{0}', space=vmem, size = 0x1000, scoped, tag = 'scoped memory for tpu_custom_call.1']
      %120 = vst [vmem:[#allocation12] sm:$0xff] %v58
      %s121 = scalar_lea.vmem [#allocation12], 4
      %v122 = vld [vmem:[%s121] sm:$0x3]
      %v123 = vunpack.c.0.f8e4m3b11 %v122
      %v124 = vunpack.c.1.f8e4m3b11 %v122
      %v125 = vunpack.c.2.f8e4m3b11 %v122
      %v126 = vunpack.c.3.f8e4m3b11 %v122
      %v127 = vand.u32 2147483647, %v123
      %vm128 = vcmp.gt.f32.partialorder %v127, 29.0
      %vm129 = vcmp.ne.f32.partialorder %v123, %v123
      %v130 = vmul.f32 %v123, 16.0
      %v131 = vsel %vm129, -0.0, %v130
      %v132 = vsel %vm128, nan, %v131
      %v133 = vand.u32 2147483647, %v124
      %vm134 = vcmp.gt.f32.partialorder %v133, 29.0
      %vm135 = vcmp.ne.f32.partialorder %v124, %v124
      %v136 = vmul.f32 %v124, 16.0
      %v137 = vsel %vm135, -0.0, %v136
      %v138 = vsel %vm134, nan, %v137
      %v139 = vand.u32 2147483647, %v125
      %vm140 = vcmp.gt.f32.partialorder %v139, 29.0
      %vm141 = vcmp.ne.f32.partialorder %v125, %v125
      %v142 = vmul.f32 %v125, 16.0
      %v143 = vsel %vm141, -0.0, %v142
      %v144 = vsel %vm140, nan, %v143
      %v145 = vand.u32 2147483647, %v126
      %vm146 = vcmp.gt.f32.partialorder %v145, 29.0
      %vm147 = vcmp.ne.f32.partialorder %v126, %v126
      %v148 = vmul.f32 %v126, 16.0
      %v149 = vsel %vm147, -0.0, %v148
      %v150 = vsel %vm146, nan, %v149
    $region29: #{tpu_custom_call.1} parent=1
      #allocation13 [shape = 'u8[4096]{0}', space=vmem, size = 0x1000, scoped, tag = 'scoped memory for tpu_custom_call.1']
      %151 = vst [vmem:[#allocation13] sm:$0xff] %v58
      %s152 = scalar_lea.vmem [#allocation13], 6
      %v153 = vld [vmem:[%s152] sm:$0x3]
      %v154 = vunpack.c.0.f8e4m3b11 %v153
      %v155 = vunpack.c.1.f8e4m3b11 %v153
      %v156 = vunpack.c.2.f8e4m3b11 %v153
      %v157 = vunpack.c.3.f8e4m3b11 %v153
      %v158 = vand.u32 2147483647, %v154
      %vm159 = vcmp.gt.f32.partialorder %v158, 29.0
      %vm160 = vcmp.ne.f32.partialorder %v154, %v154
      %v161 = vmul.f32 %v154, 16.0
      %v162 = vsel %vm160, -0.0, %v161
      %v163 = vsel %vm159, nan, %v162
      %v164 = vand.u32 2147483647, %v155
      %vm165 = vcmp.gt.f32.partialorder %v164, 29.0
      %vm166 = vcmp.ne.f32.partialorder %v155, %v155
      %v167 = vmul.f32 %v155, 16.0
      %v168 = vsel %vm166, -0.0, %v167
      %v169 = vsel %vm165, nan, %v168
      %v170 = vand.u32 2147483647, %v156
      %vm171 = vcmp.gt.f32.partialorder %v170, 29.0
      %vm172 = vcmp.ne.f32.partialorder %v156, %v156
      %v173 = vmul.f32 %v156, 16.0
      %v174 = vsel %vm172, -0.0, %v173
      %v175 = vsel %vm171, nan, %v174
      %v176 = vand.u32 2147483647, %v157
      %vm177 = vcmp.gt.f32.partialorder %v176, 29.0
      %vm178 = vcmp.ne.f32.partialorder %v157, %v157
      %v179 = vmul.f32 %v157, 16.0
      %v180 = vsel %vm178, -0.0, %v179
      %v181 = vsel %vm177, nan, %v180
    %v182 = vpack.c.bf16 %v101, %v70
    %v183 = vpack.c.bf16 %v163, %v132
    %v184 = vld [vmem:[#allocation7] sm:$0xff]
    $region30: #{tpu_custom_call.1} parent=1
      #allocation14 [shape = 'u8[4096]{0}', space=vmem, size = 0x1000, scoped, tag = 'scoped memory for tpu_custom_call.1']
      %185 = vst [vmem:[#allocation14] sm:$0xff] %v184
      %v186 = vld [vmem:[#allocation14] sm:$0x3]
      %v187 = vunpack.c.0.f8e4m3b11 %v186
      %v188 = vunpack.c.1.f8e4m3b11 %v186
      %v189 = vunpack.c.2.f8e4m3b11 %v186
      %v190 = vunpack.c.3.f8e4m3b11 %v186
      %v191 = vand.u32 2147483647, %v187
      %vm192 = vcmp.gt.f32.partialorder %v191, 29.0
      %vm193 = vcmp.ne.f32.partialorder %v187, %v187
      %v194 = vmul.f32 %v187, 16.0
      %v195 = vsel %vm193, -0.0, %v194
      %v196 = vsel %vm192, nan, %v195
      %v197 = vand.u32 2147483647, %v188
      %vm198 = vcmp.gt.f32.partialorder %v197, 29.0
      %vm199 = vcmp.ne.f32.partialorder %v188, %v188
      %v200 = vmul.f32 %v188, 16.0
      %v201 = vsel %vm199, -0.0, %v200
      %v202 = vsel %vm198, nan, %v201
      %v203 = vand.u32 2147483647, %v189
      %vm204 = vcmp.gt.f32.partialorder %v203, 29.0
      %vm205 = vcmp.ne.f32.partialorder %v189, %v189
      %v206 = vmul.f32 %v189, 16.0
      %v207 = vsel %vm205, -0.0, %v206
      %v208 = vsel %vm204, nan, %v207
      %v209 = vand.u32 2147483647, %v190
      %vm210 = vcmp.gt.f32.partialorder %v209, 29.0
      %vm211 = vcmp.ne.f32.partialorder %v190, %v190
      %v212 = vmul.f32 %v190, 16.0
      %v213 = vsel %vm211, -0.0, %v212
      %v214 = vsel %vm210, nan, %v213
    $region31: #{tpu_custom_call.1} parent=1
      #allocation15 [shape = 'u8[4096]{0}', space=vmem, size = 0x1000, scoped, tag = 'scoped memory for tpu_custom_call.1']
      %215 = vst [vmem:[#allocation15] sm:$0xff] %v184
      %s216 = scalar_lea.vmem [#allocation15], 2
      %v217 = vld [vmem:[%s216] sm:$0x3]
      %v218 = vunpack.c.0.f8e4m3b11 %v217
      %v219 = vunpack.c.1.f8e4m3b11 %v217
      %v220 = vunpack.c.2.f8e4m3b11 %v217
      %v221 = vunpack.c.3.f8e4m3b11 %v217
      %v222 = vand.u32 2147483647, %v218
      %vm223 = vcmp.gt.f32.partialorder %v222, 29.0
      %vm224 = vcmp.ne.f32.partialorder %v218, %v218
      %v225 = vmul.f32 %v218, 16.0
      %v226 = vsel %vm224, -0.0, %v225
      %v227 = vsel %vm223, nan, %v226
      %v228 = vand.u32 2147483647, %v219
      %vm229 = vcmp.gt.f32.partialorder %v228, 29.0
      %vm230 = vcmp.ne.f32.partialorder %v219, %v219
      %v231 = vmul.f32 %v219, 16.0
      %v232 = vsel %vm230, -0.0, %v231
      %v233 = vsel %vm229, nan, %v232
      %v234 = vand.u32 2147483647, %v220
      %vm235 = vcmp.gt.f32.partialorder %v234, 29.0
      %vm236 = vcmp.ne.f32.partialorder %v220, %v220
      %v237 = vmul.f32 %v220, 16.0
      %v238 = vsel %vm236, -0.0, %v237
      %v239 = vsel %vm235, nan, %v238
      %v240 = vand.u32 2147483647, %v221
      %vm241 = vcmp.gt.f32.partialorder %v240, 29.0
      %vm242 = vcmp.ne.f32.partialorder %v221, %v221
      %v243 = vmul.f32 %v221, 16.0
      %v244 = vsel %vm242, -0.0, %v243
      %v245 = vsel %vm241, nan, %v244
    $region32: #{tpu_custom_call.1} parent=1
      #allocation16 [shape = 'u8[4096]{0}', space=vmem, size = 0x1000, scoped, tag = 'scoped memory for tpu_custom_call.1']
      %246 = vst [vmem:[#allocation16] sm:$0xff] %v184
      %s247 = scalar_lea.vmem [#allocation16], 4
      %v248 = vld [vmem:[%s247] sm:$0x3]
      %v249 = vunpack.c.0.f8e4m3b11 %v248
      %v250 = vunpack.c.1.f8e4m3b11 %v248
      %v251 = vunpack.c.2.f8e4m3b11 %v248
      %v252 = vunpack.c.3.f8e4m3b11 %v248
      %v253 = vand.u32 2147483647, %v249
      %vm254 = vcmp.gt.f32.partialorder %v253, 29.0
      %vm255 = vcmp.ne.f32.partialorder %v249, %v249
      %v256 = vmul.f32 %v249, 16.0
      %v257 = vsel %vm255, -0.0, %v256
      %v258 = vsel %vm254, nan, %v257
      %v259 = vand.u32 2147483647, %v250
      %vm260 = vcmp.gt.f32.partialorder %v259, 29.0
      %vm261 = vcmp.ne.f32.partialorder %v250, %v250
      %v262 = vmul.f32 %v250, 16.0
      %v263 = vsel %vm261, -0.0, %v262
      %v264 = vsel %vm260, nan, %v263
      %v265 = vand.u32 2147483647, %v251
      %vm266 = vcmp.gt.f32.partialorder %v265, 29.0
      %vm267 = vcmp.ne.f32.partialorder %v251, %v251
      %v268 = vmul.f32 %v251, 16.0
      %v269 = vsel %vm267, -0.0, %v268
      %v270 = vsel %vm266, nan, %v269
      %v271 = vand.u32 2147483647, %v252
      %vm272 = vcmp.gt.f32.partialorder %v271, 29.0
      %vm273 = vcmp.ne.f32.partialorder %v252, %v252
      %v274 = vmul.f32 %v252, 16.0
      %v275 = vsel %vm273, -0.0, %v274
      %v276 = vsel %vm272, nan, %v275
    $region33: #{tpu_custom_call.1} parent=1
      #allocation17 [shape = 'u8[4096]{0}', space=vmem, size = 0x1000, scoped, tag = 'scoped memory for tpu_custom_call.1']
      %277 = vst [vmem:[#allocation17] sm:$0xff] %v184
      %s278 = scalar_lea.vmem [#allocation17], 6
      %v279 = vld [vmem:[%s278] sm:$0x3]
      %v280 = vunpack.c.0.f8e4m3b11 %v279
      %v281 = vunpack.c.1.f8e4m3b11 %v279
      %v282 = vunpack.c.2.f8e4m3b11 %v279
      %v283 = vunpack.c.3.f8e4m3b11 %v279
      %v284 = vand.u32 2147483647, %v280
      %vm285 = vcmp.gt.f32.partialorder %v284, 29.0
      %vm286 = vcmp.ne.f32.partialorder %v280, %v280
      %v287 = vmul.f32 %v280, 16.0
      %v288 = vsel %vm286, -0.0, %v287
      %v289 = vsel %vm285, nan, %v288
      %v290 = vand.u32 2147483647, %v281
      %vm291 = vcmp.gt.f32.partialorder %v290, 29.0
      %vm292 = vcmp.ne.f32.partialorder %v281, %v281
      %v293 = vmul.f32 %v281, 16.0
      %v294 = vsel %vm292, -0.0, %v293
      %v295 = vsel %vm291, nan, %v294
      %v296 = vand.u32 2147483647, %v282
      %vm297 = vcmp.gt.f32.partialorder %v296, 29.0
      %vm298 = vcmp.ne.f32.partialorder %v282, %v282
      %v299 = vmul.f32 %v282, 16.0
      %v300 = vsel %vm298, -0.0, %v299
      %v301 = vsel %vm297, nan, %v300
      %v302 = vand.u32 2147483647, %v283
      %vm303 = vcmp.gt.f32.partialorder %v302, 29.0
      %vm304 = vcmp.ne.f32.partialorder %v283, %v283
      %v305 = vmul.f32 %v283, 16.0
      %v306 = vsel %vm304, -0.0, %v305
      %v307 = vsel %vm303, nan, %v306
    %v308 = vpack.c.bf16 %v227, %v196
    %v309 = vpack.c.bf16 %v289, %v258
    %vm310 = vcmask 261120
    %v312 = vsel %vm310, %v182, 0
    %v315 = vsel %vm310, %v183, 0
    %317 = vmatpush.bf16.msra.mxu0 0
    %318 = vmatpush.bf16.msra.mxu0 0
    %319 = vmatpush.bf16.msra.mxu0 0
    %320 = vmatpush.bf16.msra.mxu0 0
    %321 = vmatpush.bf16.msra.mxu0 0
    %322 = vmatpush.bf16.msra.mxu0 0
    %323 = vmatpush.bf16.msra.mxu0 %v309
    %324 = vmatpush.bf16.msra.mxu0 %v308
    %325 = vmatmul.bf16.gmra.mxu0 %v312
    %v326 = vpop.f32.mrf.mxu0
    %v327 = vadd.f32 0.0, %v326
    %v328 = vpop.f32.mrf.mxu0
    %v329 = vadd.f32 0.0, %v328
    %330 = vmatmul.bf16.gmra.mxu0 %v315
    %v331 = vpop.f32.mrf.mxu0
    %v332 = vadd.f32 0.0, %v331
    %v333 = vpop.f32.mrf.mxu0
    %v334 = vadd.f32 0.0, %v333
    %335 = vdwg.mxu0
    %v336 = vadd.f32 %v54, %v327
    %v337 = vadd.f32 %v55, %v329
    %v338 = vadd.f32 %v56, %v332
    %v339 = vadd.f32 %v57, %v334
    %vm340 = vcmask 785408
    %341 = vst.msk [vmem:[#allocation2] sm:$0xff] %vm340, %v336
    %342 = vst.msk [vmem:[#allocation2 + $0x8] sm:$0xff] %vm340, %v337
    %343 = vst.msk [vmem:[#allocation2 + $0x10] sm:$0xff] %vm340, %v338
    %344 = vst.msk [vmem:[#allocation2 + $0x18] sm:$0xff] %vm340, %v339
    // Predicated region
    $region34: #{tpu_custom_call.1} parent=1 // pred_check
      %p345 = pneg %p45
    $region35: #{tpu_custom_call.1} parent=1 // pred_check_branch
      %347 = sbr.rel (%p345) target = $region37
    $region36: #{tpu_custom_call.1} parent=1 // pred_region
      %v348 = vld [vmem:[#allocation2] sm:$0xff]
      %v349 = vld [vmem:[#allocation2 + $0x8] sm:$0xff]
      %v350 = vld [vmem:[#allocation2 + $0x10] sm:$0xff]
      %v351 = vld [vmem:[#allocation2 + $0x18] sm:$0xff]
      %s352 = sld [smem:[#allocation3]]
      %v353 = vstv %s352
      %v354 = vmul.f32 %v348, %v353
      %v355 = vmul.f32 %v349, %v353
      %v356 = vmul.f32 %v350, %v353
      %v357 = vmul.f32 %v351, %v353
      %v358 = vpack.c.bf16 %v354, %v354
      %v359 = vpack.c.bf16 %v355, %v355
      %v360 = vpack.c.bf16 %v356, %v356
      %v361 = vpack.c.bf16 %v357, %v357
      %vm362 = vcmask 781312
      %363 = vst.msk [vmem:[#allocation9] sm:$0xf] %vm362, %v358
      %364 = vst.msk [vmem:[#allocation9 + $0x4] sm:$0xf] %vm362, %v359
      %365 = vst.msk [vmem:[#allocation9 + $0x8] sm:$0xf] %vm362, %v360
      %366 = vst.msk [vmem:[#allocation9 + $0xc] sm:$0xf] %vm362, %v361
    $region37: #{tpu_custom_call.1} parent=1 // pred_fallthru
      _
    // Predicated region
    $region38: #{tpu_custom_call.1} parent=1 // pred_check
      _
    $region39: #{tpu_custom_call.1} parent=1 // pred_check_branch
      %368 = sbr.rel (0) target = $region41
    $region40: #{tpu_custom_call.1} parent=1 // pred_region
      %370 = vsyncadd [#allocation6], 0
      %s371 = sshll.u32 [#allocation9], 4
      %s372 = int_to_ptr.vmem [resolvable:$true] %s371
      %s373 = sshll.u32 %s3, 4
      %s374 = int_to_ptr.hbm [resolvable:$true] %s373
      %379 = dma.vmem_to_hbm [thread:$0]  %s372, 256, %s374, [#allocation6], 64, 64, 4
    $region41: #{tpu_custom_call.1} parent=1 // pred_fallthru
      _
    // Predicated region
    $region42: #{tpu_custom_call.1} parent=1 // pred_check
      _
    $region43: #{tpu_custom_call.1} parent=1 // pred_check_branch
      %381 = sbr.rel (0) target = $region45
    $region44: #{tpu_custom_call.1} parent=1 // pred_region
      %383 = dma.done [#allocation6], 256
    $region45: #{tpu_custom_call.1} parent=1 // pred_fallthru
      _
    %384 = vsyncpa [#allocation5], 1
    %385 = vsyncpa [#allocation8], 1
    %386 = vsyncpa [#allocation6], 1

</llo_original>
